<compile_context>
chip_gen: v5e
topology: v5e:2x2
jax: 0.10.0
libtpu: 0.0.40
codegen_flags: <defaults>
</compile_context>

<pallas_src>
import jax
import jax.numpy as jnp
from jax.experimental import pallas as pl
from jax.experimental.pallas import tpu as pltpu

EPS = 1e-5
LANES = 128

# Static row offsets inside the main (128-lane) weight blob.
_R2 = 0          # fc2       : rows   0:256, lanes 0:128 (real)
_R3 = 256        # fc_feature: rows 256:384, lanes 0:64  (real), 64:128 zero
_R4 = 384        # fc_1      : rows 384:448, lanes 0:64  (real), rest zero
_R5 = 512        # fc_2      : rows 512:576, lanes 64:72 (real), rest zero
_WROWS = 256 + 3 * 128


def _round_up(n, m):
    return (n + m - 1) // m * m


def _mish(x):
    # mish(x) = x * tanh(softplus(x)) = x * (1 - 2 / ((1+e^x)^2 + 1))
    # -> one EUP exp + one approx reciprocal (vs exp+log1p+tanh).
    # Clamp: mish(x) ~= x for x > 20 and exp(20)^2 stays inside f32 range.
    e = jnp.exp(jnp.minimum(x, 20.0))
    d = (1.0 + e) * (1.0 + e) + 1.0
    return x * (1.0 - 2.0 * pl.reciprocal(d, approx=True))


def _batchnorm_train(x):
    # BatchNorm1d(affine=False), training mode: biased variance over the batch.
    # Single-pass E[x^2]-E[x]^2 with a non-negativity clamp (f32 cancellation guard).
    mean = jnp.mean(x, axis=0, keepdims=True)
    mean_sq = jnp.mean(x * x, axis=0, keepdims=True)
    var = jnp.maximum(mean_sq - mean * mean, 0.0)
    return (x - mean) * jax.lax.rsqrt(var + EPS)


def _net_kernel(x_ref, w1_ref, w_ref, b_ref, out_ref):
    x = x_ref[...]                               # (B, ifp) bf16 (cast in wrapper)
    bias = b_ref[...]                            # (8, 256) f32

    def dot(a, w):                               # bf16 x bf16 -> f32 accumulate
        return jnp.dot(a.astype(jnp.bfloat16), w,
                       preferred_element_type=jnp.float32)

    # fc1: ONE (B,ifp) x (ifp,256) matmul + mish
    h1 = _mish(dot(x, w1_ref[...]) + bias[0:1, :])
    # fc2: ONE k=256 contraction against the contiguous 256-row region + mish
    h2 = _mish(dot(h1, w_ref[_R2:_R2 + 256, :]) + bias[1:2, 0:128])
    # batchnorm1 (128, affine=False, training stats)
    h2 = _batchnorm_train(h2)
    # fc_feature + mish + batchnorm2 (lanes 64:128 are exact zero padding)
    feat = _mish(dot(h2, w_ref[_R3:_R3 + 128, :]) + bias[2:3, 0:128])
    feat = _batchnorm_train(feat)
    # fc_1 + residual + mish (padded lanes remain exactly zero)
    y = _mish(dot(feat, w_ref[_R4:_R4 + 128, :]) + bias[3:4, 0:128] + feat)
    # fc_2: real weight block sits at lanes 64:72, so adding feat (zero there)
    # yields the single lane-dense output slab  [ feature | logits | 0 ].
    out_ref[...] = dot(y, w_ref[_R5:_R5 + 128, :]) + bias[4:5, 0:128] + feat


def pack_params(params, in_feature):
    """Pack the 10 Linear params into: fc1 bf16 blob, main bf16 blob, f32 bias blob."""
    (w1, b1, w2, b2, wf, bf_, w3, b3, w4, b4) = params
    ifp = _round_up(max(in_feature, 16), 16)      # bf16 sublane-tile multiple

    # fc1 weight: its own (ifp, 256) bf16 blob (pre-transposed to (in, out)).
    w1blob = jnp.zeros((ifp, 256), jnp.float32).at[0:in_feature, :].set(w1)
    w1blob = w1blob.astype(jnp.bfloat16)

    # Main 128-lane blob: fc2 as one contiguous 256-row region, then 128-row regions.
    wblob = jnp.zeros((_WROWS, LANES), jnp.float32)
    wblob = wblob.at[_R2:_R2 + 256, :].set(w2)
    wblob = wblob.at[_R3:_R3 + 128, 0:64].set(wf)
    wblob = wblob.at[_R4:_R4 + 64, 0:64].set(w3)
    wblob = wblob.at[_R5:_R5 + 64, 64:72].set(w4)
    wblob = wblob.astype(jnp.bfloat16)

    bblob = jnp.zeros((8, 256), jnp.float32)
    bblob = bblob.at[0, :].set(b1[0])             # fc1 bias (256)
    bblob = bblob.at[1, 0:128].set(b2[0])         # fc2 bias
    bblob = bblob.at[2, 0:64].set(bf_[0])         # fc_feature bias
    bblob = bblob.at[3, 0:64].set(b3[0])          # fc_1 bias
    bblob = bblob.at[4, 64:72].set(b4[0])         # fc_2 bias -> lanes 64:72
    return w1blob, wblob, bblob


def net_forward(x, w1blob, wblob, bblob):
    """Returns (logits, feature), matching the PyTorch forward's (x, feature)."""
    B, in_feature = x.shape
    if B % 8 != 0:
        # Padding rows is not allowed: BatchNorm uses whole-batch statistics.
        raise ValueError("batch must be a multiple of 8 (16 preferred for bf16 packing)")
    ifp = w1blob.shape[0]
    if ifp != in_feature:
        x = jnp.pad(x, ((0, 0), (0, ifp - in_feature)))
    x = x.astype(jnp.bfloat16)                    # halve the per-row input DMA

    bytes_in = x.size * 2 + w1blob.size * 2 + wblob.size * 2 + bblob.size * 4
    bytes_out = B * LANES * 4
    # 2x for double-buffering + generous room for f32 temporaries (~16 live (B,256) f32).
    vmem_limit = int(min(2 * (bytes_in + bytes_out) + 64 * B * 256 + (2 << 20), 64 << 20))
    flops = 2 * B * (ifp * 256 + 256 * 128 + 3 * 128 * 128)
    transcendentals = B * (256 + 3 * 128) + 4 * 128   # mish exps + BN rsqrts (rough)

    vmem = pl.BlockSpec(memory_space=pltpu.VMEM)
    # Tiny model (~0.2 MiB of params): single grid point, everything VMEM-resident.
    slab = pl.pallas_call(
        _net_kernel,
        out_shape=jax.ShapeDtypeStruct((B, LANES), jnp.float32),
        in_specs=[vmem, vmem, vmem, vmem],
        out_specs=vmem,
        compiler_params=pltpu.CompilerParams(vmem_limit_bytes=vmem_limit),
        cost_estimate=pl.CostEstimate(flops=flops,
                                      transcendentals=transcendentals,
                                      bytes_accessed=bytes_in + bytes_out),
    )(x, w1blob, wblob, bblob)
    # Lane-dense slab -> split in the wrapper (free layout plumbing).
    return slab[:, 64:72], slab[:, 0:64]


def init_params(key, in_feature):
    """Deterministic init mimicking nn.Linear default (uniform(+-1/sqrt(fan_in)))."""
    dims = [(in_feature, 256), (256, 128), (128, 64), (64, 64), (64, 8)]
    params = []
    for i, (fan_in, fan_out) in enumerate(dims):
        kw, kb = jax.random.split(jax.random.fold_in(key, i))
        bound = 1.0 / jnp.sqrt(jnp.float32(fan_in))
        # stored as (in, out) so the kernel computes x @ W + b
        w = jax.random.uniform(kw, (fan_in, fan_out), jnp.float32, -bound, bound)
        b = jax.random.uniform(kb, (1, fan_out), jnp.float32, -bound, bound)
        params += [w, b]
    return tuple(params)


def reference_forward(x, params):
    """Pure-JAX reference with the same bf16-operand / f32-accumulate matmul
    numerics as the kernel, exact mish and two-pass BN."""
    (w1, b1, w2, b2, wf, bf_, w3, b3, w4, b4) = params

    def dot16(a, w):
        return jnp.dot(a.astype(jnp.bfloat16), w.astype(jnp.bfloat16),
                       preferred_element_type=jnp.float32)

    def mish(v):
        return v * jnp.tanh(jnp.logaddexp(v, 0.0))

    def bn(v):
        mean = jnp.mean(v, axis=0, keepdims=True)
        var = jnp.mean((v - mean) ** 2, axis=0, keepdims=True)
        return (v - mean) * jax.lax.rsqrt(var + EPS)

    h = mish(dot16(x, w1) + b1)
    h = mish(dot16(h, w2) + b2)
    h = bn(h)
    feat = mish(dot16(h, wf) + bf_)
    feat = bn(feat)
    y = mish(dot16(feat, w3) + b3 + feat)
    y = dot16(y, w4) + b4
    return y, feat


if __name__ == "__main__":
    key = jax.random.PRNGKey(0)
    in_feature = 32
    batch = 16

    kx, kp = jax.random.split(key)
    x = jax.random.normal(kx, (batch, in_feature), jnp.float32)
    params = init_params(kp, in_feature)
    w1blob, wblob, bblob = pack_params(params, in_feature)

    out, feat = net_forward(x, w1blob, wblob, bblob)
    out, feat = jax.block_until_ready((out, feat))

    ref_out, ref_feat = reference_forward(x, params)
    assert out.shape == (batch, 8) and feat.shape == (batch, 64)
    # tolerance accounts for bf16 input cast, single-exp mish and approx reciprocal
    assert jnp.allclose(out, ref_out, atol=5e-2, rtol=5e-2), \
        float(jnp.max(jnp.abs(out - ref_out)))
    assert jnp.allclose(feat, ref_feat, atol=5e-2, rtol=5e-2), \
        float(jnp.max(jnp.abs(feat - ref_feat)))

    print("KERNEL_OK")
</pallas_src>

<mosaic_0001>
module attributes {stable_mosaic.version = 11 : i64} {
  func.func @_net_kernel(%arg0: memref<16x32xbf16, #tpu.memory_space<vmem>>, %arg1: memref<32x256xbf16, #tpu.memory_space<vmem>>, %arg2: memref<640x128xbf16, #tpu.memory_space<vmem>>, %arg3: memref<8x256xf32, #tpu.memory_space<vmem>>, %arg4: memref<16x128xf32, #tpu.memory_space<vmem>>) attributes {dimension_semantics = [], scalar_prefetch = 0 : i64, scratch_operands = 0 : i64, tpu.core_type = #tpu.core_type<tc>} {
    %c0 = arith.constant 0 : index
    %c0_0 = arith.constant 0 : index
    %0 = vector.load %arg0[%c0, %c0_0] : memref<16x32xbf16, #tpu.memory_space<vmem>>, vector<16x32xbf16>
    %c0_1 = arith.constant 0 : index
    %c0_2 = arith.constant 0 : index
    %1 = vector.load %arg3[%c0_1, %c0_2] : memref<8x256xf32, #tpu.memory_space<vmem>>, vector<8x256xf32>
    %c0_3 = arith.constant 0 : index
    %c0_4 = arith.constant 0 : index
    %2 = vector.load %arg1[%c0_3, %c0_4] : memref<32x256xbf16, #tpu.memory_space<vmem>>, vector<32x256xbf16>
    %cst = arith.constant dense<0.000000e+00> : vector<16x256xf32>
    %3 = tpu.matmul %0, %2, %cst {dimension_numbers = #tpu.dot_dimension_numbers<[1], [0], [0], [1], [0, 0, 1, 1], [], []>} : vector<16x32xbf16>, vector<32x256xbf16>, vector<16x256xf32> -> vector<16x256xf32>
    %4 = vector.extract_strided_slice %1 {offsets = [0, 0], sizes = [1, 256], strides = [1, 1]} : vector<8x256xf32> to vector<1x256xf32>
    %5 = vector.broadcast %4 : vector<1x256xf32> to vector<16x256xf32>
    %6 = arith.addf %3, %5 : vector<16x256xf32>
    %cst_5 = arith.constant 2.000000e+01 : f32
    %7 = vector.broadcast %cst_5 : f32 to vector<16x256xf32>
    %8 = arith.minimumf %6, %7 : vector<16x256xf32>
    %9 = math.exp %8 : vector<16x256xf32>
    %cst_6 = arith.constant 1.000000e+00 : f32
    %10 = vector.broadcast %cst_6 : f32 to vector<16x256xf32>
    %11 = arith.addf %10, %9 : vector<16x256xf32>
    %cst_7 = arith.constant 1.000000e+00 : f32
    %12 = vector.broadcast %cst_7 : f32 to vector<16x256xf32>
    %13 = arith.addf %12, %9 : vector<16x256xf32>
    %14 = arith.mulf %11, %13 : vector<16x256xf32>
    %cst_8 = arith.constant 1.000000e+00 : f32
    %15 = vector.broadcast %cst_8 : f32 to vector<16x256xf32>
    %16 = arith.addf %14, %15 : vector<16x256xf32>
    %17 = tpu.reciprocal %16 {approx = true} : vector<16x256xf32> -> vector<16x256xf32>
    %cst_9 = arith.constant 2.000000e+00 : f32
    %18 = vector.broadcast %cst_9 : f32 to vector<16x256xf32>
    %19 = arith.mulf %18, %17 : vector<16x256xf32>
    %cst_10 = arith.constant 1.000000e+00 : f32
    %20 = vector.broadcast %cst_10 : f32 to vector<16x256xf32>
    %21 = arith.subf %20, %19 : vector<16x256xf32>
    %22 = arith.mulf %6, %21 : vector<16x256xf32>
    %c0_11 = arith.constant 0 : index
    %c0_12 = arith.constant 0 : index
    %23 = vector.load %arg2[%c0_11, %c0_12] : memref<640x128xbf16, #tpu.memory_space<vmem>>, vector<256x128xbf16>
    %24 = arith.truncf %22 : vector<16x256xf32> to vector<16x256xbf16>
    %cst_13 = arith.constant dense<0.000000e+00> : vector<16x128xf32>
    %25 = tpu.matmul %24, %23, %cst_13 {dimension_numbers = #tpu.dot_dimension_numbers<[1], [0], [0], [1], [0, 0, 1, 1], [], []>} : vector<16x256xbf16>, vector<256x128xbf16>, vector<16x128xf32> -> vector<16x128xf32>
    %26 = vector.extract_strided_slice %1 {offsets = [1, 0], sizes = [1, 128], strides = [1, 1]} : vector<8x256xf32> to vector<1x128xf32>
    %27 = vector.broadcast %26 : vector<1x128xf32> to vector<16x128xf32>
    %28 = arith.addf %25, %27 : vector<16x128xf32>
    %cst_14 = arith.constant 2.000000e+01 : f32
    %29 = vector.broadcast %cst_14 : f32 to vector<16x128xf32>
    %30 = arith.minimumf %28, %29 : vector<16x128xf32>
    %31 = math.exp %30 : vector<16x128xf32>
    %cst_15 = arith.constant 1.000000e+00 : f32
    %32 = vector.broadcast %cst_15 : f32 to vector<16x128xf32>
    %33 = arith.addf %32, %31 : vector<16x128xf32>
    %cst_16 = arith.constant 1.000000e+00 : f32
    %34 = vector.broadcast %cst_16 : f32 to vector<16x128xf32>
    %35 = arith.addf %34, %31 : vector<16x128xf32>
    %36 = arith.mulf %33, %35 : vector<16x128xf32>
    %cst_17 = arith.constant 1.000000e+00 : f32
    %37 = vector.broadcast %cst_17 : f32 to vector<16x128xf32>
    %38 = arith.addf %36, %37 : vector<16x128xf32>
    %39 = tpu.reciprocal %38 {approx = true} : vector<16x128xf32> -> vector<16x128xf32>
    %cst_18 = arith.constant 2.000000e+00 : f32
    %40 = vector.broadcast %cst_18 : f32 to vector<16x128xf32>
    %41 = arith.mulf %40, %39 : vector<16x128xf32>
    %cst_19 = arith.constant 1.000000e+00 : f32
    %42 = vector.broadcast %cst_19 : f32 to vector<16x128xf32>
    %43 = arith.subf %42, %41 : vector<16x128xf32>
    %44 = arith.mulf %28, %43 : vector<16x128xf32>
    %cst_20 = arith.constant dense<0.000000e+00> : vector<128xf32>
    %45 = vector.multi_reduction <add>, %44, %cst_20 [0] : vector<16x128xf32> to vector<128xf32>
    %46 = vector.shape_cast %45 : vector<128xf32> to vector<1x128xf32>
    %cst_21 = arith.constant 1.600000e+01 : f32
    %47 = vector.broadcast %cst_21 : f32 to vector<1x128xf32>
    %48 = arith.divf %46, %47 : vector<1x128xf32>
    %49 = arith.mulf %44, %44 : vector<16x128xf32>
    %cst_22 = arith.constant dense<0.000000e+00> : vector<128xf32>
    %50 = vector.multi_reduction <add>, %49, %cst_22 [0] : vector<16x128xf32> to vector<128xf32>
    %51 = vector.shape_cast %50 : vector<128xf32> to vector<1x128xf32>
    %cst_23 = arith.constant 1.600000e+01 : f32
    %52 = vector.broadcast %cst_23 : f32 to vector<1x128xf32>
    %53 = arith.divf %51, %52 : vector<1x128xf32>
    %54 = arith.mulf %48, %48 : vector<1x128xf32>
    %55 = arith.subf %53, %54 : vector<1x128xf32>
    %cst_24 = arith.constant 0.000000e+00 : f32
    %56 = vector.broadcast %cst_24 : f32 to vector<1x128xf32>
    %57 = arith.maximumf %55, %56 : vector<1x128xf32>
    %58 = vector.broadcast %48 : vector<1x128xf32> to vector<16x128xf32>
    %59 = arith.subf %44, %58 : vector<16x128xf32>
    %cst_25 = arith.constant 9.99999974E-6 : f32
    %60 = vector.broadcast %cst_25 : f32 to vector<1x128xf32>
    %61 = arith.addf %57, %60 : vector<1x128xf32>
    %62 = math.rsqrt %61 : vector<1x128xf32>
    %63 = vector.broadcast %62 : vector<1x128xf32> to vector<16x128xf32>
    %64 = arith.mulf %59, %63 : vector<16x128xf32>
    %c256 = arith.constant 256 : index
    %c0_26 = arith.constant 0 : index
    %65 = vector.load %arg2[%c256, %c0_26] : memref<640x128xbf16, #tpu.memory_space<vmem>>, vector<128x128xbf16>
    %66 = arith.truncf %64 : vector<16x128xf32> to vector<16x128xbf16>
    %cst_27 = arith.constant dense<0.000000e+00> : vector<16x128xf32>
    %67 = tpu.matmul %66, %65, %cst_27 {dimension_numbers = #tpu.dot_dimension_numbers<[1], [0], [0], [1], [0, 0, 1, 1], [], []>} : vector<16x128xbf16>, vector<128x128xbf16>, vector<16x128xf32> -> vector<16x128xf32>
    %68 = vector.extract_strided_slice %1 {offsets = [2, 0], sizes = [1, 128], strides = [1, 1]} : vector<8x256xf32> to vector<1x128xf32>
    %69 = vector.broadcast %68 : vector<1x128xf32> to vector<16x128xf32>
    %70 = arith.addf %67, %69 : vector<16x128xf32>
    %cst_28 = arith.constant 2.000000e+01 : f32
    %71 = vector.broadcast %cst_28 : f32 to vector<16x128xf32>
    %72 = arith.minimumf %70, %71 : vector<16x128xf32>
    %73 = math.exp %72 : vector<16x128xf32>
    %cst_29 = arith.constant 1.000000e+00 : f32
    %74 = vector.broadcast %cst_29 : f32 to vector<16x128xf32>
    %75 = arith.addf %74, %73 : vector<16x128xf32>
    %cst_30 = arith.constant 1.000000e+00 : f32
    %76 = vector.broadcast %cst_30 : f32 to vector<16x128xf32>
    %77 = arith.addf %76, %73 : vector<16x128xf32>
    %78 = arith.mulf %75, %77 : vector<16x128xf32>
    %cst_31 = arith.constant 1.000000e+00 : f32
    %79 = vector.broadcast %cst_31 : f32 to vector<16x128xf32>
    %80 = arith.addf %78, %79 : vector<16x128xf32>
    %81 = tpu.reciprocal %80 {approx = true} : vector<16x128xf32> -> vector<16x128xf32>
    %cst_32 = arith.constant 2.000000e+00 : f32
    %82 = vector.broadcast %cst_32 : f32 to vector<16x128xf32>
    %83 = arith.mulf %82, %81 : vector<16x128xf32>
    %cst_33 = arith.constant 1.000000e+00 : f32
    %84 = vector.broadcast %cst_33 : f32 to vector<16x128xf32>
    %85 = arith.subf %84, %83 : vector<16x128xf32>
    %86 = arith.mulf %70, %85 : vector<16x128xf32>
    %cst_34 = arith.constant dense<0.000000e+00> : vector<128xf32>
    %87 = vector.multi_reduction <add>, %86, %cst_34 [0] : vector<16x128xf32> to vector<128xf32>
    %88 = vector.shape_cast %87 : vector<128xf32> to vector<1x128xf32>
    %cst_35 = arith.constant 1.600000e+01 : f32
    %89 = vector.broadcast %cst_35 : f32 to vector<1x128xf32>
    %90 = arith.divf %88, %89 : vector<1x128xf32>
    %91 = arith.mulf %86, %86 : vector<16x128xf32>
    %cst_36 = arith.constant dense<0.000000e+00> : vector<128xf32>
    %92 = vector.multi_reduction <add>, %91, %cst_36 [0] : vector<16x128xf32> to vector<128xf32>
    %93 = vector.shape_cast %92 : vector<128xf32> to vector<1x128xf32>
    %cst_37 = arith.constant 1.600000e+01 : f32
    %94 = vector.broadcast %cst_37 : f32 to vector<1x128xf32>
    %95 = arith.divf %93, %94 : vector<1x128xf32>
    %96 = arith.mulf %90, %90 : vector<1x128xf32>
    %97 = arith.subf %95, %96 : vector<1x128xf32>
    %cst_38 = arith.constant 0.000000e+00 : f32
    %98 = vector.broadcast %cst_38 : f32 to vector<1x128xf32>
    %99 = arith.maximumf %97, %98 : vector<1x128xf32>
    %100 = vector.broadcast %90 : vector<1x128xf32> to vector<16x128xf32>
    %101 = arith.subf %86, %100 : vector<16x128xf32>
    %cst_39 = arith.constant 9.99999974E-6 : f32
    %102 = vector.broadcast %cst_39 : f32 to vector<1x128xf32>
    %103 = arith.addf %99, %102 : vector<1x128xf32>
    %104 = math.rsqrt %103 : vector<1x128xf32>
    %105 = vector.broadcast %104 : vector<1x128xf32> to vector<16x128xf32>
    %106 = arith.mulf %101, %105 : vector<16x128xf32>
    %c384 = arith.constant 384 : index
    %c0_40 = arith.constant 0 : index
    %107 = vector.load %arg2[%c384, %c0_40] : memref<640x128xbf16, #tpu.memory_space<vmem>>, vector<128x128xbf16>
    %108 = arith.truncf %106 : vector<16x128xf32> to vector<16x128xbf16>
    %cst_41 = arith.constant dense<0.000000e+00> : vector<16x128xf32>
    %109 = tpu.matmul %108, %107, %cst_41 {dimension_numbers = #tpu.dot_dimension_numbers<[1], [0], [0], [1], [0, 0, 1, 1], [], []>} : vector<16x128xbf16>, vector<128x128xbf16>, vector<16x128xf32> -> vector<16x128xf32>
    %110 = vector.extract_strided_slice %1 {offsets = [3, 0], sizes = [1, 128], strides = [1, 1]} : vector<8x256xf32> to vector<1x128xf32>
    %111 = vector.broadcast %110 : vector<1x128xf32> to vector<16x128xf32>
    %112 = arith.addf %109, %111 : vector<16x128xf32>
    %113 = arith.addf %112, %106 : vector<16x128xf32>
    %cst_42 = arith.constant 2.000000e+01 : f32
    %114 = vector.broadcast %cst_42 : f32 to vector<16x128xf32>
    %115 = arith.minimumf %113, %114 : vector<16x128xf32>
    %116 = math.exp %115 : vector<16x128xf32>
    %cst_43 = arith.constant 1.000000e+00 : f32
    %117 = vector.broadcast %cst_43 : f32 to vector<16x128xf32>
    %118 = arith.addf %117, %116 : vector<16x128xf32>
    %cst_44 = arith.constant 1.000000e+00 : f32
    %119 = vector.broadcast %cst_44 : f32 to vector<16x128xf32>
    %120 = arith.addf %119, %116 : vector<16x128xf32>
    %121 = arith.mulf %118, %120 : vector<16x128xf32>
    %cst_45 = arith.constant 1.000000e+00 : f32
    %122 = vector.broadcast %cst_45 : f32 to vector<16x128xf32>
    %123 = arith.addf %121, %122 : vector<16x128xf32>
    %124 = tpu.reciprocal %123 {approx = true} : vector<16x128xf32> -> vector<16x128xf32>
    %cst_46 = arith.constant 2.000000e+00 : f32
    %125 = vector.broadcast %cst_46 : f32 to vector<16x128xf32>
    %126 = arith.mulf %125, %124 : vector<16x128xf32>
    %cst_47 = arith.constant 1.000000e+00 : f32
    %127 = vector.broadcast %cst_47 : f32 to vector<16x128xf32>
    %128 = arith.subf %127, %126 : vector<16x128xf32>
    %129 = arith.mulf %113, %128 : vector<16x128xf32>
    %c512 = arith.constant 512 : index
    %c0_48 = arith.constant 0 : index
    %130 = vector.load %arg2[%c512, %c0_48] : memref<640x128xbf16, #tpu.memory_space<vmem>>, vector<128x128xbf16>
    %131 = arith.truncf %129 : vector<16x128xf32> to vector<16x128xbf16>
    %cst_49 = arith.constant dense<0.000000e+00> : vector<16x128xf32>
    %132 = tpu.matmul %131, %130, %cst_49 {dimension_numbers = #tpu.dot_dimension_numbers<[1], [0], [0], [1], [0, 0, 1, 1], [], []>} : vector<16x128xbf16>, vector<128x128xbf16>, vector<16x128xf32> -> vector<16x128xf32>
    %133 = vector.extract_strided_slice %1 {offsets = [4, 0], sizes = [1, 128], strides = [1, 1]} : vector<8x256xf32> to vector<1x128xf32>
    %134 = vector.broadcast %133 : vector<1x128xf32> to vector<16x128xf32>
    %135 = arith.addf %132, %134 : vector<16x128xf32>
    %136 = arith.addf %135, %106 : vector<16x128xf32>
    %c0_50 = arith.constant 0 : index
    %c0_51 = arith.constant 0 : index
    %137 = vector.load %arg4[%c0_50, %c0_51] : memref<16x128xf32, #tpu.memory_space<vmem>>, vector<16x128xf32>
    tpu.vector_store %arg4[%c0_50, %c0_51], %136 {strides = array<i32>} : memref<16x128xf32, #tpu.memory_space<vmem>>, vector<16x128xf32>,
    return
  }
}

</mosaic_0001>

<llo_original>
// kernel: tpu_custom_call.1
$region0: #{tpu_custom_call.1}
  #allocation0 [shape = 'u32[]', space=smem, size = 0x4, offset = 0x4, fixed_abs, tag = 'smem constant byte address 0x4 - core index']
  #allocation1 [shape = 'u32[72,128]{1,0:T(1,128)}', space=vmem, size = 0x9000, scoped, tag = 'internal scratch']
  %s0 = inlined_call_operand.hbm [shape: bf16[16,32], index: 0, kind: input, shape index: {}]
  %s1 = inlined_call_operand.hbm [shape: bf16[32,256], index: 1, kind: input, shape index: {}]
  %s2 = inlined_call_operand.hbm [shape: bf16[640,128], index: 2, kind: input, shape index: {}]
  %s3 = inlined_call_operand.hbm [shape: f32[8,256], index: 3, kind: input, shape index: {}]
  %s4 = inlined_call_operand.hbm [shape: f32[16,128], index: 4, kind: output, shape index: {}]
  %s5 = sld [smem:[#allocation0]]
  $region42: #{tpu_custom_call.1} parent=0
    _
  %s7 = ssub.s32 1, %s5
  %s8 = scalar_select 0, %s7, %s5
  $region1: #{tpu_custom_call.1} parent=0
    #allocation2 [shape = 'u8[4096]{0}', space=vmem, size = 0x1000, scoped, tag = 'input window, operand 0, single buffered']
    #allocation3 [shape = 's32[1]{0}', space=sflag, size = 0x4, scoped, tag = 'scoped memory for tpu_custom_call.1']
    #allocation4 [shape = 's32[1]{0}', space=sflag, size = 0x4, scoped, tag = 'scoped memory for tpu_custom_call.1']
    #allocation5 [shape = 'u8[16384]{0}', space=vmem, size = 0x4000, scoped, tag = 'input window, operand 1, single buffered']
    #allocation6 [shape = 's32[1]{0}', space=sflag, size = 0x4, scoped, tag = 'scoped memory for tpu_custom_call.1']
    #allocation7 [shape = 'u8[163840]{0}', space=vmem, size = 0x28000, scoped, tag = 'input window, operand 2, single buffered']
    #allocation8 [shape = 'u8[8192]{0}', space=vmem, size = 0x2000, scoped, tag = 'input window, operand 3, single buffered']
    #allocation9 [shape = 's32[1]{0}', space=sflag, size = 0x4, scoped, tag = 'scoped memory for tpu_custom_call.1']
    #allocation10 [shape = 'u8[8192]{0}', space=vmem, size = 0x2000, scoped, tag = 'output window, operand 0, single buffered']
    %9 = vsyncpa [#allocation3], 0
    %10 = vsyncpa [#allocation6], 0
    %11 = vsyncpa [#allocation9], 0
    %12 = vsyncpa [#allocation4], 0
    // Predicated region
    $region2: #{tpu_custom_call.1} parent=1 // pred_check
      _
    $region3: #{tpu_custom_call.1} parent=1 // pred_check_branch
      %14 = sbr.rel (0) target = $region5
    $region4: #{tpu_custom_call.1} parent=1 // pred_region
      %16 = vsyncadd [#allocation3], 0
      %s17 = sshll.u32 %s0, 4
      %s18 = int_to_ptr.hbm [resolvable:$true] %s17
      %s19 = sshll.u32 [#allocation2], 4
      %s20 = int_to_ptr.vmem [resolvable:$true] %s19
      %25 = dma.hbm_to_vmem [thread:$0]  %s18, 128, %s20, [#allocation3], 64, 64, 4
    $region5: #{tpu_custom_call.1} parent=1 // pred_fallthru
      _
    // Predicated region
    $region6: #{tpu_custom_call.1} parent=1 // pred_check
      _
    $region7: #{tpu_custom_call.1} parent=1 // pred_check_branch
      %27 = sbr.rel (0) target = $region9
    $region8: #{tpu_custom_call.1} parent=1 // pred_region
      %29 = vsyncadd [#allocation6], 0
      %s30 = sshll.u32 %s1, 4
      %s31 = int_to_ptr.hbm [resolvable:$true] %s30
      %s32 = sshll.u32 [#allocation5], 4
      %s33 = int_to_ptr.vmem [resolvable:$true] %s32
      %38 = dma.hbm_to_vmem [thread:$0]  %s31, 512, %s33, [#allocation6], 128, 128, 8
    $region9: #{tpu_custom_call.1} parent=1 // pred_fallthru
      _
    // Predicated region
    $region10: #{tpu_custom_call.1} parent=1 // pred_check
      _
    $region11: #{tpu_custom_call.1} parent=1 // pred_check_branch
      %40 = sbr.rel (0) target = $region13
    $region12: #{tpu_custom_call.1} parent=1 // pred_region
      %42 = vsyncadd [#allocation6], 0
      %s43 = sshll.u32 %s2, 4
      %s44 = int_to_ptr.hbm [resolvable:$true] %s43
      %s45 = sshll.u32 [#allocation7], 4
      %s46 = int_to_ptr.vmem [resolvable:$true] %s45
      %51 = dma.hbm_to_vmem [thread:$0]  %s44, 5120, %s46, [#allocation6], 64, 64, 4
    $region13: #{tpu_custom_call.1} parent=1 // pred_fallthru
      _
    // Predicated region
    $region14: #{tpu_custom_call.1} parent=1 // pred_check
      _
    $region15: #{tpu_custom_call.1} parent=1 // pred_check_branch
      %53 = sbr.rel (0) target = $region17
    $region16: #{tpu_custom_call.1} parent=1 // pred_region
      %55 = vsyncadd [#allocation9], 0
      %s57 = sshll.u32 %s3, 4
      %s58 = int_to_ptr.hbm [resolvable:$true] %s57
      %s59 = sshll.u32 [#allocation8], 4
      %s60 = int_to_ptr.vmem [resolvable:$true] %s59
      %62 = dma.hbm_to_vmem [thread:$0]  %s58, 256, %s60, [#allocation9]
    $region17: #{tpu_custom_call.1} parent=1 // pred_fallthru
      _
    // Predicated region
    $region18: #{tpu_custom_call.1} parent=1 // pred_check
      _
    $region19: #{tpu_custom_call.1} parent=1 // pred_check_branch
      %64 = sbr.rel (0) target = $region21
    $region20: #{tpu_custom_call.1} parent=1 // pred_region
      %66 = dma.done [#allocation3], 128
    $region21: #{tpu_custom_call.1} parent=1 // pred_fallthru
      _
    // Predicated region
    $region22: #{tpu_custom_call.1} parent=1 // pred_check
      _
    $region23: #{tpu_custom_call.1} parent=1 // pred_check_branch
      %68 = sbr.rel (0) target = $region25
    $region24: #{tpu_custom_call.1} parent=1 // pred_region
      %70 = dma.done [#allocation6], 512
    $region25: #{tpu_custom_call.1} parent=1 // pred_fallthru
      _
    // Predicated region
    $region26: #{tpu_custom_call.1} parent=1 // pred_check
      _
    $region27: #{tpu_custom_call.1} parent=1 // pred_check_branch
      %72 = sbr.rel (0) target = $region29
    $region28: #{tpu_custom_call.1} parent=1 // pred_region
      %74 = dma.done [#allocation6], 5120
    $region29: #{tpu_custom_call.1} parent=1 // pred_fallthru
      _
    // Predicated region
    $region30: #{tpu_custom_call.1} parent=1 // pred_check
      _
    $region31: #{tpu_custom_call.1} parent=1 // pred_check_branch
      %76 = sbr.rel (0) target = $region33
    $region32: #{tpu_custom_call.1} parent=1 // pred_region
      %78 = dma.done [#allocation9], 256
    $region33: #{tpu_custom_call.1} parent=1 // pred_fallthru
      _
    %v80 = vld [vmem:[#allocation2] sm:$0xf]
    %v81 = vld [vmem:[#allocation2 + $0x4] sm:$0xf]
    %v82 = vld [vmem:[#allocation8] sm:$0xff]
    %v83 = vld [vmem:[#allocation8 + $0x8] sm:$0xff]
    %v84 = vld [vmem:[#allocation5] sm:$0xff]
    %v85 = vld [vmem:[#allocation5 + $0x8] sm:$0xff]
    %v86 = vld [vmem:[#allocation5 + $0x10] sm:$0xff]
    %v87 = vld [vmem:[#allocation5 + $0x18] sm:$0xff]
    %v88 = vperm.slane %v82, 0
    %v89 = vperm.slane %v83, 0
    %v92 = vunpack.c.l.b16 %v80
    %v93 = vunpack.c.l.b16 %v81
    %v94 = vpack.c.b16 %v93, %v92
    %v99 = vunpack.c.l.b16 %v84
    %v100 = vunpack.c.h.b16 %v84
    %v101 = vunpack.c.l.b16 %v85
    %v102 = vunpack.c.h.b16 %v85
    %v103 = vunpack.c.l.b16 %v86
    %v104 = vunpack.c.h.b16 %v86
    %v105 = vunpack.c.l.b16 %v87
    %v106 = vunpack.c.h.b16 %v87
    %v107 = vpack.c.b16 %v101, %v99
    %v108 = vpack.c.b16 %v102, %v100
    %v109 = vpack.c.b16 %v105, %v103
    %v110 = vpack.c.b16 %v106, %v104
    %vm115 = vcmask 261120
    %v117 = vsel %vm115, %v94, 0
    %119 = vmatpush.bf16.msra.mxu0 0
    %120 = vmatpush.bf16.msra.mxu0 0
    %121 = vmatpush.bf16.msra.mxu0 0
    %122 = vmatpush.bf16.msra.mxu0 0
    %123 = vmatpush.bf16.msra.mxu0 0
    %124 = vmatpush.bf16.msra.mxu0 0
    %125 = vmatpush.bf16.msra.mxu0 %v109
    %126 = vmatpush.bf16.msra.mxu0 %v107
    %127 = vmatmul.bf16.gmra.mxu0 %v117
    %v128 = vpop.f32.mrf.mxu0
    %v129 = vadd.f32 %v88, %v128
    %v130 = vpop.f32.mrf.mxu0
    %v131 = vadd.f32 %v88, %v130
    %132 = vdwg.mxu0
    %133 = vmatpush.bf16.msra.mxu0 0
    %134 = vmatpush.bf16.msra.mxu0 0
    %135 = vmatpush.bf16.msra.mxu0 0
    %136 = vmatpush.bf16.msra.mxu0 0
    %137 = vmatpush.bf16.msra.mxu0 0
    %138 = vmatpush.bf16.msra.mxu0 0
    %139 = vmatpush.bf16.msra.mxu0 %v110
    %140 = vmatpush.bf16.msra.mxu0 %v108
    %141 = vmatmul.bf16.gmra.mxu0 %v117
    %v142 = vpop.f32.mrf.mxu0
    %v143 = vadd.f32 %v89, %v142
    %v144 = vpop.f32.mrf.mxu0
    %v145 = vadd.f32 %v89, %v144
    %146 = vdwg.mxu0
    %v147 = vmin.f32 %v129, 20.0
    %v148 = vmin.f32 %v143, 20.0
    %v149 = vmin.f32 %v131, 20.0
    %v150 = vmin.f32 %v145, 20.0
    %v151 = vmul.f32 %v147, 1.442695
    %v152 = vpow.pop %v151
    %v153 = vmul.f32 %v148, 1.442695
    %v154 = vpow.pop %v153
    %v155 = vmul.f32 %v149, 1.442695
    %v156 = vpow.pop %v155
    %v157 = vmul.f32 %v150, 1.442695
    %v158 = vpow.pop %v157
    %v159 = vadd.f32 %v152, 1.0
    %v160 = vadd.f32 %v154, 1.0
    %v161 = vadd.f32 %v156, 1.0
    %v162 = vadd.f32 %v158, 1.0
    %v163 = vmul.f32 %v159, %v159
    %v164 = vmul.f32 %v160, %v160
    %v165 = vmul.f32 %v161, %v161
    %v166 = vmul.f32 %v162, %v162
    %v167 = vadd.f32 %v163, 1.0
    %v168 = vadd.f32 %v164, 1.0
    %v169 = vadd.f32 %v165, 1.0
    %v170 = vadd.f32 %v166, 1.0
    %v171 = vrcp.pop %v167
    %v172 = vrcp.pop %v168
    %v173 = vrcp.pop %v169
    %v174 = vrcp.pop %v170
    %v175 = vmul.f32 %v171, 2.0
    %v176 = vmul.f32 %v172, 2.0
    %v177 = vmul.f32 %v173, 2.0
    %v178 = vmul.f32 %v174, 2.0
    %v179 = vsub.f32 1.0, %v175
    %v180 = vsub.f32 1.0, %v176
    %v181 = vsub.f32 1.0, %v177
    %v182 = vsub.f32 1.0, %v178
    %v183 = vmul.f32 %v129, %v179
    %v184 = vmul.f32 %v143, %v180
    %v185 = vmul.f32 %v131, %v181
    %v186 = vmul.f32 %v145, %v182
    %v187 = vld [vmem:[#allocation7] sm:$0xf]
    %v188 = vld [vmem:[#allocation7 + $0x4] sm:$0xf]
    %v189 = vld [vmem:[#allocation7 + $0x8] sm:$0xf]
    %v190 = vld [vmem:[#allocation7 + $0xc] sm:$0xf]
    %v191 = vld [vmem:[#allocation7 + $0x10] sm:$0xf]
    %v192 = vld [vmem:[#allocation7 + $0x14] sm:$0xf]
    %v193 = vld [vmem:[#allocation7 + $0x18] sm:$0xf]
    %v194 = vld [vmem:[#allocation7 + $0x1c] sm:$0xf]
    %v195 = vld [vmem:[#allocation7 + $0x20] sm:$0xf]
    %v196 = vld [vmem:[#allocation7 + $0x24] sm:$0xf]
    %v197 = vld [vmem:[#allocation7 + $0x28] sm:$0xf]
    %v198 = vld [vmem:[#allocation7 + $0x2c] sm:$0xf]
    %v199 = vld [vmem:[#allocation7 + $0x30] sm:$0xf]
    %v200 = vld [vmem:[#allocation7 + $0x34] sm:$0xf]
    %v201 = vld [vmem:[#allocation7 + $0x38] sm:$0xf]
    %v202 = vld [vmem:[#allocation7 + $0x3c] sm:$0xf]
    %v203 = vld [vmem:[#allocation7 + $0x40] sm:$0xf]
    %v204 = vld [vmem:[#allocation7 + $0x44] sm:$0xf]
    %v205 = vld [vmem:[#allocation7 + $0x48] sm:$0xf]
    %v206 = vld [vmem:[#allocation7 + $0x4c] sm:$0xf]
    %v207 = vld [vmem:[#allocation7 + $0x50] sm:$0xf]
    %v208 = vld [vmem:[#allocation7 + $0x54] sm:$0xf]
    %v209 = vld [vmem:[#allocation7 + $0x58] sm:$0xf]
    %v210 = vld [vmem:[#allocation7 + $0x5c] sm:$0xf]
    %v211 = vld [vmem:[#allocation7 + $0x60] sm:$0xf]
    %v212 = vld [vmem:[#allocation7 + $0x64] sm:$0xf]
    %v213 = vld [vmem:[#allocation7 + $0x68] sm:$0xf]
    %v214 = vld [vmem:[#allocation7 + $0x6c] sm:$0xf]
    %v215 = vld [vmem:[#allocation7 + $0x70] sm:$0xf]
    %v216 = vld [vmem:[#allocation7 + $0x74] sm:$0xf]
    %v217 = vld [vmem:[#allocation7 + $0x78] sm:$0xf]
    %v218 = vld [vmem:[#allocation7 + $0x7c] sm:$0xf]
    %v219 = vpack.c.bf16 %v185, %v183
    %v220 = vpack.c.bf16 %v186, %v184
    %v221 = vperm.slane %v82, 1
    %v254 = vunpack.c.l.b16 %v187
    %v255 = vunpack.c.l.b16 %v188
    %v256 = vunpack.c.l.b16 %v189
    %v257 = vunpack.c.l.b16 %v190
    %v258 = vunpack.c.l.b16 %v191
    %v259 = vunpack.c.l.b16 %v192
    %v260 = vunpack.c.l.b16 %v193
    %v261 = vunpack.c.l.b16 %v194
    %v262 = vunpack.c.l.b16 %v195
    %v263 = vunpack.c.l.b16 %v196
    %v264 = vunpack.c.l.b16 %v197
    %v265 = vunpack.c.l.b16 %v198
    %v266 = vunpack.c.l.b16 %v199
    %v267 = vunpack.c.l.b16 %v200
    %v268 = vunpack.c.l.b16 %v201
    %v269 = vunpack.c.l.b16 %v202
    %v270 = vunpack.c.l.b16 %v203
    %v271 = vunpack.c.l.b16 %v204
    %v272 = vunpack.c.l.b16 %v205
    %v273 = vunpack.c.l.b16 %v206
    %v274 = vunpack.c.l.b16 %v207
    %v275 = vunpack.c.l.b16 %v208
    %v276 = vunpack.c.l.b16 %v209
    %v277 = vunpack.c.l.b16 %v210
    %v278 = vunpack.c.l.b16 %v211
    %v279 = vunpack.c.l.b16 %v212
    %v280 = vunpack.c.l.b16 %v213
    %v281 = vunpack.c.l.b16 %v214
    %v282 = vunpack.c.l.b16 %v215
    %v283 = vunpack.c.l.b16 %v216
    %v284 = vunpack.c.l.b16 %v217
    %v285 = vunpack.c.l.b16 %v218
    %v286 = vpack.c.b16 %v255, %v254
    %v287 = vpack.c.b16 %v257, %v256
    %v288 = vpack.c.b16 %v259, %v258
    %v289 = vpack.c.b16 %v261, %v260
    %v290 = vpack.c.b16 %v263, %v262
    %v291 = vpack.c.b16 %v265, %v264
    %v292 = vpack.c.b16 %v267, %v266
    %v293 = vpack.c.b16 %v269, %v268
    %v294 = vpack.c.b16 %v271, %v270
    %v295 = vpack.c.b16 %v273, %v272
    %v296 = vpack.c.b16 %v275, %v274
    %v297 = vpack.c.b16 %v277, %v276
    %v298 = vpack.c.b16 %v279, %v278
    %v299 = vpack.c.b16 %v281, %v280
    %v300 = vpack.c.b16 %v283, %v282
    %v301 = vpack.c.b16 %v285, %v284
    %318 = vmatpush.bf16.msra.mxu0 %v293
    %319 = vmatpush.bf16.msra.mxu0 %v292
    %320 = vmatpush.bf16.msra.mxu0 %v291
    %321 = vmatpush.bf16.msra.mxu0 %v290
    %322 = vmatpush.bf16.msra.mxu0 %v289
    %323 = vmatpush.bf16.msra.mxu0 %v288
    %324 = vmatpush.bf16.msra.mxu0 %v287
    %325 = vmatpush.bf16.msra.mxu0 %v286
    %326 = vmatmul.bf16.gmra.mxu0 %v219
    %v327 = vpop.f32.mrf.mxu0
    %v328 = vadd.f32 %v221, %v327
    %v329 = vpop.f32.mrf.mxu0
    %v330 = vadd.f32 %v221, %v329
    %331 = vdwg.mxu0
    %332 = vmatpush.bf16.msra.mxu0 %v301
    %333 = vmatpush.bf16.msra.mxu0 %v300
    %334 = vmatpush.bf16.msra.mxu0 %v299
    %335 = vmatpush.bf16.msra.mxu0 %v298
    %336 = vmatpush.bf16.msra.mxu0 %v297
    %337 = vmatpush.bf16.msra.mxu0 %v296
    %338 = vmatpush.bf16.msra.mxu0 %v295
    %339 = vmatpush.bf16.msra.mxu0 %v294
    %340 = vmatmul.bf16.gmra.mxu0 %v220
    %v341 = vpop.f32.mrf.mxu0
    %v342 = vadd.f32 %v328, %v341
    %v343 = vpop.f32.mrf.mxu0
    %v344 = vadd.f32 %v330, %v343
    %345 = vdwg.mxu0
    %v346 = vmin.f32 %v342, 20.0
    %v347 = vmin.f32 %v344, 20.0
    %v348 = vmul.f32 %v346, 1.442695
    %v349 = vpow.pop %v348
    %v350 = vmul.f32 %v347, 1.442695
    %v351 = vpow.pop %v350
    %v352 = vadd.f32 %v349, 1.0
    %v353 = vadd.f32 %v351, 1.0
    %v354 = vmul.f32 %v352, %v352
    %v355 = vmul.f32 %v353, %v353
    %v356 = vadd.f32 %v354, 1.0
    %v357 = vadd.f32 %v355, 1.0
    %v358 = vrcp.pop %v356
    %v359 = vrcp.pop %v357
    %v360 = vmul.f32 %v358, 2.0
    %v361 = vmul.f32 %v359, 2.0
    %v362 = vsub.f32 1.0, %v360
    %v363 = vsub.f32 1.0, %v361
    %v364 = vmul.f32 %v342, %v362
    %v365 = vmul.f32 %v344, %v363
    %v366 = vadd.f32 %v364, %v365
    %v367 = vrot.slane %v366, 4
    %v368 = vadd.f32 %v366, %v367
    %v369 = vrot.slane %v368, 2
    %v370 = vadd.f32 %v368, %v369
    %v371 = vrot.slane %v370, 1
    %v372 = vadd.f32 %v370, %v371
    %v373 = vrcp.pop 16.0
    %v374 = vmul.f32 16.0, %v373
    %v375 = vsub.f32 1.0, %v374
    %v376 = vmul.f32 %v373, %v375
    %v377 = vadd.f32 %v373, %v376
    %vm378 = vweird.f32 %v373
    %v379 = vsel %vm378, %v373, %v377
    %v380 = vmul.f32 %v372, %v379
    %v381 = vmul.f32 %v364, %v364
    %v382 = vmul.f32 %v365, %v365
    %v383 = vadd.f32 %v381, %v382
    %v384 = vrot.slane %v383, 4
    %v385 = vadd.f32 %v383, %v384
    %v386 = vrot.slane %v385, 2
    %v387 = vadd.f32 %v385, %v386
    %v388 = vrot.slane %v387, 1
    %v389 = vadd.f32 %v387, %v388
    %v390 = vmul.f32 %v389, %v379
    %v391 = vmul.f32 %v380, %v380
    %v392 = vsub.f32 %v390, %v391
    %v393 = vmax.f32 %v392, 0.0
    %v394 = vsub.f32 %v364, %v380
    %v395 = vsub.f32 %v365, %v380
    %v396 = vadd.f32 %v393, 1e-05
    %v397 = vrsqrt.pop %v396
    %v398 = vmul.f32 %v397, %v396
    %v399 = vmul.f32 %v398, %v397
    %v400 = vmul.f32 0.5, %v399
    %v401 = vsub.f32 1.5, %v400
    %v402 = vmul.f32 %v397, %v401
    %vm403 = vweird.f32 %v396
    %vm404 = vweird.f32 %v397
    %vm405 = vmor %vm403, %vm404
    %v406 = vsel %vm405, %v397, %v402
    %v407 = vmul.f32 %v394, %v406
    %v408 = vmul.f32 %v395, %v406
    %v409 = vld [vmem:[#allocation7 + $0x80] sm:$0xf]
    %v410 = vld [vmem:[#allocation7 + $0x84] sm:$0xf]
    %v411 = vld [vmem:[#allocation7 + $0x88] sm:$0xf]
    %v412 = vld [vmem:[#allocation7 + $0x8c] sm:$0xf]
    %v413 = vld [vmem:[#allocation7 + $0x90] sm:$0xf]
    %v414 = vld [vmem:[#allocation7 + $0x94] sm:$0xf]
    %v415 = vld [vmem:[#allocation7 + $0x98] sm:$0xf]
    %v416 = vld [vmem:[#allocation7 + $0x9c] sm:$0xf]
    %v417 = vld [vmem:[#allocation7 + $0xa0] sm:$0xf]
    %v418 = vld [vmem:[#allocation7 + $0xa4] sm:$0xf]
    %v419 = vld [vmem:[#allocation7 + $0xa8] sm:$0xf]
    %v420 = vld [vmem:[#allocation7 + $0xac] sm:$0xf]
    %v421 = vld [vmem:[#allocation7 + $0xb0] sm:$0xf]
    %v422 = vld [vmem:[#allocation7 + $0xb4] sm:$0xf]
    %v423 = vld [vmem:[#allocation7 + $0xb8] sm:$0xf]
    %v424 = vld [vmem:[#allocation7 + $0xbc] sm:$0xf]
    %v425 = vpack.c.bf16 %v408, %v407
    %v426 = vperm.slane %v82, 2
    %v443 = vunpack.c.l.b16 %v409
    %v444 = vunpack.c.l.b16 %v410
    %v445 = vunpack.c.l.b16 %v411
    %v446 = vunpack.c.l.b16 %v412
    %v447 = vunpack.c.l.b16 %v413
    %v448 = vunpack.c.l.b16 %v414
    %v449 = vunpack.c.l.b16 %v415
    %v450 = vunpack.c.l.b16 %v416
    %v451 = vunpack.c.l.b16 %v417
    %v452 = vunpack.c.l.b16 %v418
    %v453 = vunpack.c.l.b16 %v419
    %v454 = vunpack.c.l.b16 %v420
    %v455 = vunpack.c.l.b16 %v421
    %v456 = vunpack.c.l.b16 %v422
    %v457 = vunpack.c.l.b16 %v423
    %v458 = vunpack.c.l.b16 %v424
    %v459 = vpack.c.b16 %v444, %v443
    %v460 = vpack.c.b16 %v446, %v445
    %v461 = vpack.c.b16 %v448, %v447
    %v462 = vpack.c.b16 %v450, %v449
    %v463 = vpack.c.b16 %v452, %v451
    %v464 = vpack.c.b16 %v454, %v453
    %v465 = vpack.c.b16 %v456, %v455
    %v466 = vpack.c.b16 %v458, %v457
    %475 = vmatpush.bf16.msra.mxu0 %v466
    %476 = vmatpush.bf16.msra.mxu0 %v465
    %477 = vmatpush.bf16.msra.mxu0 %v464
    %478 = vmatpush.bf16.msra.mxu0 %v463
    %479 = vmatpush.bf16.msra.mxu0 %v462
    %480 = vmatpush.bf16.msra.mxu0 %v461
    %481 = vmatpush.bf16.msra.mxu0 %v460
    %482 = vmatpush.bf16.msra.mxu0 %v459
    %483 = vmatmul.bf16.gmra.mxu0 %v425
    %v484 = vpop.f32.mrf.mxu0
    %v485 = vadd.f32 %v426, %v484
    %v486 = vpop.f32.mrf.mxu0
    %v487 = vadd.f32 %v426, %v486
    %488 = vdwg.mxu0
    %v489 = vmin.f32 %v485, 20.0
    %v490 = vmin.f32 %v487, 20.0
    %v491 = vmul.f32 %v489, 1.442695
    %v492 = vpow.pop %v491
    %v493 = vmul.f32 %v490, 1.442695
    %v494 = vpow.pop %v493
    %v495 = vadd.f32 %v492, 1.0
    %v496 = vadd.f32 %v494, 1.0
    %v497 = vmul.f32 %v495, %v495
    %v498 = vmul.f32 %v496, %v496
    %v499 = vadd.f32 %v497, 1.0
    %v500 = vadd.f32 %v498, 1.0
    %v501 = vrcp.pop %v499
    %v502 = vrcp.pop %v500
    %v503 = vmul.f32 %v501, 2.0
    %v504 = vmul.f32 %v502, 2.0
    %v505 = vsub.f32 1.0, %v503
    %v506 = vsub.f32 1.0, %v504
    %v507 = vmul.f32 %v485, %v505
    %v508 = vmul.f32 %v487, %v506
    %v509 = vadd.f32 %v507, %v508
    %v510 = vrot.slane %v509, 4
    %v511 = vadd.f32 %v509, %v510
    %v512 = vrot.slane %v511, 2
    %v513 = vadd.f32 %v511, %v512
    %v514 = vrot.slane %v513, 1
    %v515 = vadd.f32 %v513, %v514
    %v516 = vmul.f32 %v515, %v379
    %v517 = vmul.f32 %v507, %v507
    %v518 = vmul.f32 %v508, %v508
    %v519 = vadd.f32 %v517, %v518
    %v520 = vrot.slane %v519, 4
    %v521 = vadd.f32 %v519, %v520
    %v522 = vrot.slane %v521, 2
    %v523 = vadd.f32 %v521, %v522
    %v524 = vrot.slane %v523, 1
    %v525 = vadd.f32 %v523, %v524
    %v526 = vmul.f32 %v525, %v379
    %v527 = vmul.f32 %v516, %v516
    %v528 = vsub.f32 %v526, %v527
    %v529 = vmax.f32 %v528, 0.0
    %v530 = vsub.f32 %v507, %v516
    %v531 = vsub.f32 %v508, %v516
    %v532 = vadd.f32 %v529, 1e-05
    %v533 = vrsqrt.pop %v532
    %v534 = vmul.f32 %v533, %v532
    %v535 = vmul.f32 %v534, %v533
    %v536 = vmul.f32 0.5, %v535
    %v537 = vsub.f32 1.5, %v536
    %v538 = vmul.f32 %v533, %v537
    %vm539 = vweird.f32 %v532
    %vm540 = vweird.f32 %v533
    %vm541 = vmor %vm539, %vm540
    %v542 = vsel %vm541, %v533, %v538
    %v543 = vmul.f32 %v530, %v542
    %v544 = vmul.f32 %v531, %v542
    %v545 = vld [vmem:[#allocation7 + $0xc0] sm:$0xf]
    %v546 = vld [vmem:[#allocation7 + $0xc4] sm:$0xf]
    %v547 = vld [vmem:[#allocation7 + $0xc8] sm:$0xf]
    %v548 = vld [vmem:[#allocation7 + $0xcc] sm:$0xf]
    %v549 = vld [vmem:[#allocation7 + $0xd0] sm:$0xf]
    %v550 = vld [vmem:[#allocation7 + $0xd4] sm:$0xf]
    %v551 = vld [vmem:[#allocation7 + $0xd8] sm:$0xf]
    %v552 = vld [vmem:[#allocation7 + $0xdc] sm:$0xf]
    %v553 = vld [vmem:[#allocation7 + $0xe0] sm:$0xf]
    %v554 = vld [vmem:[#allocation7 + $0xe4] sm:$0xf]
    %v555 = vld [vmem:[#allocation7 + $0xe8] sm:$0xf]
    %v556 = vld [vmem:[#allocation7 + $0xec] sm:$0xf]
    %v557 = vld [vmem:[#allocation7 + $0xf0] sm:$0xf]
    %v558 = vld [vmem:[#allocation7 + $0xf4] sm:$0xf]
    %v559 = vld [vmem:[#allocation7 + $0xf8] sm:$0xf]
    %v560 = vld [vmem:[#allocation7 + $0xfc] sm:$0xf]
    %v561 = vpack.c.bf16 %v544, %v543
    %v562 = vperm.slane %v82, 3
    %v579 = vunpack.c.l.b16 %v545
    %v580 = vunpack.c.l.b16 %v546
    %v581 = vunpack.c.l.b16 %v547
    %v582 = vunpack.c.l.b16 %v548
    %v583 = vunpack.c.l.b16 %v549
    %v584 = vunpack.c.l.b16 %v550
    %v585 = vunpack.c.l.b16 %v551
    %v586 = vunpack.c.l.b16 %v552
    %v587 = vunpack.c.l.b16 %v553
    %v588 = vunpack.c.l.b16 %v554
    %v589 = vunpack.c.l.b16 %v555
    %v590 = vunpack.c.l.b16 %v556
    %v591 = vunpack.c.l.b16 %v557
    %v592 = vunpack.c.l.b16 %v558
    %v593 = vunpack.c.l.b16 %v559
    %v594 = vunpack.c.l.b16 %v560
    %v595 = vpack.c.b16 %v580, %v579
    %v596 = vpack.c.b16 %v582, %v581
    %v597 = vpack.c.b16 %v584, %v583
    %v598 = vpack.c.b16 %v586, %v585
    %v599 = vpack.c.b16 %v588, %v587
    %v600 = vpack.c.b16 %v590, %v589
    %v601 = vpack.c.b16 %v592, %v591
    %v602 = vpack.c.b16 %v594, %v593
    %611 = vmatpush.bf16.msra.mxu0 %v602
    %612 = vmatpush.bf16.msra.mxu0 %v601
    %613 = vmatpush.bf16.msra.mxu0 %v600
    %614 = vmatpush.bf16.msra.mxu0 %v599
    %615 = vmatpush.bf16.msra.mxu0 %v598
    %616 = vmatpush.bf16.msra.mxu0 %v597
    %617 = vmatpush.bf16.msra.mxu0 %v596
    %618 = vmatpush.bf16.msra.mxu0 %v595
    %619 = vmatmul.bf16.gmra.mxu0 %v561
    %v620 = vpop.f32.mrf.mxu0
    %v621 = vadd.f32 %v562, %v620
    %v622 = vpop.f32.mrf.mxu0
    %v623 = vadd.f32 %v562, %v622
    %624 = vdwg.mxu0
    %v625 = vadd.f32 %v621, %v543
    %v626 = vadd.f32 %v623, %v544
    %v627 = vmin.f32 %v625, 20.0
    %v628 = vmin.f32 %v626, 20.0
    %v629 = vmul.f32 %v627, 1.442695
    %v630 = vpow.pop %v629
    %v631 = vmul.f32 %v628, 1.442695
    %v632 = vpow.pop %v631
    %v633 = vadd.f32 %v630, 1.0
    %v634 = vadd.f32 %v632, 1.0
    %v635 = vmul.f32 %v633, %v633
    %v636 = vmul.f32 %v634, %v634
    %v637 = vadd.f32 %v635, 1.0
    %v638 = vadd.f32 %v636, 1.0
    %v639 = vrcp.pop %v637
    %v640 = vrcp.pop %v638
    %v641 = vmul.f32 %v639, 2.0
    %v642 = vmul.f32 %v640, 2.0
    %v643 = vsub.f32 1.0, %v641
    %v644 = vsub.f32 1.0, %v642
    %v645 = vmul.f32 %v625, %v643
    %v646 = vmul.f32 %v626, %v644
    %v647 = vld [vmem:[#allocation7 + $0x100] sm:$0xf]
    %v648 = vld [vmem:[#allocation7 + $0x104] sm:$0xf]
    %v649 = vld [vmem:[#allocation7 + $0x108] sm:$0xf]
    %v650 = vld [vmem:[#allocation7 + $0x10c] sm:$0xf]
    %v651 = vld [vmem:[#allocation7 + $0x110] sm:$0xf]
    %v652 = vld [vmem:[#allocation7 + $0x114] sm:$0xf]
    %v653 = vld [vmem:[#allocation7 + $0x118] sm:$0xf]
    %v654 = vld [vmem:[#allocation7 + $0x11c] sm:$0xf]
    %v655 = vld [vmem:[#allocation7 + $0x120] sm:$0xf]
    %v656 = vld [vmem:[#allocation7 + $0x124] sm:$0xf]
    %v657 = vld [vmem:[#allocation7 + $0x128] sm:$0xf]
    %v658 = vld [vmem:[#allocation7 + $0x12c] sm:$0xf]
    %v659 = vld [vmem:[#allocation7 + $0x130] sm:$0xf]
    %v660 = vld [vmem:[#allocation7 + $0x134] sm:$0xf]
    %v661 = vld [vmem:[#allocation7 + $0x138] sm:$0xf]
    %v662 = vld [vmem:[#allocation7 + $0x13c] sm:$0xf]
    %v663 = vpack.c.bf16 %v646, %v645
    %v664 = vperm.slane %v82, 4
    %v681 = vunpack.c.l.b16 %v647
    %v682 = vunpack.c.l.b16 %v648
    %v683 = vunpack.c.l.b16 %v649
    %v684 = vunpack.c.l.b16 %v650
    %v685 = vunpack.c.l.b16 %v651
    %v686 = vunpack.c.l.b16 %v652
    %v687 = vunpack.c.l.b16 %v653
    %v688 = vunpack.c.l.b16 %v654
    %v689 = vunpack.c.l.b16 %v655
    %v690 = vunpack.c.l.b16 %v656
    %v691 = vunpack.c.l.b16 %v657
    %v692 = vunpack.c.l.b16 %v658
    %v693 = vunpack.c.l.b16 %v659
    %v694 = vunpack.c.l.b16 %v660
    %v695 = vunpack.c.l.b16 %v661
    %v696 = vunpack.c.l.b16 %v662
    %v697 = vpack.c.b16 %v682, %v681
    %v698 = vpack.c.b16 %v684, %v683
    %v699 = vpack.c.b16 %v686, %v685
    %v700 = vpack.c.b16 %v688, %v687
    %v701 = vpack.c.b16 %v690, %v689
    %v702 = vpack.c.b16 %v692, %v691
    %v703 = vpack.c.b16 %v694, %v693
    %v704 = vpack.c.b16 %v696, %v695
    %713 = vmatpush.bf16.msra.mxu0 %v704
    %714 = vmatpush.bf16.msra.mxu0 %v703
    %715 = vmatpush.bf16.msra.mxu0 %v702
    %716 = vmatpush.bf16.msra.mxu0 %v701
    %717 = vmatpush.bf16.msra.mxu0 %v700
    %718 = vmatpush.bf16.msra.mxu0 %v699
    %719 = vmatpush.bf16.msra.mxu0 %v698
    %720 = vmatpush.bf16.msra.mxu0 %v697
    %721 = vmatmul.bf16.gmra.mxu0 %v663
    %v722 = vpop.f32.mrf.mxu0
    %v723 = vadd.f32 %v664, %v722
    %v724 = vpop.f32.mrf.mxu0
    %v725 = vadd.f32 %v664, %v724
    %726 = vdwg.mxu0
    %v727 = vadd.f32 %v723, %v543
    %v728 = vadd.f32 %v725, %v544
    %729 = vst [vmem:[#allocation10] sm:$0xff] %v727
    %730 = vst [vmem:[#allocation10 + $0x8] sm:$0xff] %v728
    // Predicated region
    $region34: #{tpu_custom_call.1} parent=1 // pred_check
      _
    $region35: #{tpu_custom_call.1} parent=1 // pred_check_branch
      %732 = sbr.rel (0) target = $region37
    $region36: #{tpu_custom_call.1} parent=1 // pred_region
      %734 = vsyncadd [#allocation4], 0
      %s735 = sshll.u32 [#allocation10], 4
      %s736 = int_to_ptr.vmem [resolvable:$true] %s735
      %s737 = sshll.u32 %s4, 4
      %s738 = int_to_ptr.hbm [resolvable:$true] %s737
      %743 = dma.vmem_to_hbm [thread:$0]  %s736, 256, %s738, [#allocation4], 128, 128, 8
    $region37: #{tpu_custom_call.1} parent=1 // pred_fallthru
      _
    // Predicated region
    $region38: #{tpu_custom_call.1} parent=1 // pred_check
      _
    $region39: #{tpu_custom_call.1} parent=1 // pred_check_branch
      %745 = sbr.rel (0) target = $region41
    $region40: #{tpu_custom_call.1} parent=1 // pred_region
      %747 = dma.done [#allocation4], 256
    $region41: #{tpu_custom_call.1} parent=1 // pred_fallthru
      _
    %748 = vsyncpa [#allocation3], 1
    %749 = vsyncpa [#allocation6], 1
    %750 = vsyncpa [#allocation9], 1
    %751 = vsyncpa [#allocation4], 1

</llo_original>
